<compile_context>
chip_gen: v5e
topology: v5e:2x2
jax: 0.10.0
libtpu: 0.0.40
codegen_flags: <defaults>
</compile_context>

<pallas_src>
import functools

import jax
import jax.numpy as jnp
from jax.experimental import pallas as pl
from jax.experimental.pallas import tpu as pltpu

LANE = 128   # TPU lane width
SUBL = 16    # bf16 sublane packing (multiple of the 8-row f32 sublane tile)
DEFAULT_ROW_TILE = 512   # per-step overhead ~0.35us; >=512-row tiles hit ~85% of HBM roofline


def _round_up(x, m):
    return (x + m - 1) // m * m


def _activ(x, name):
    if name == "relu":
        return jnp.maximum(x, 0.0)
    if name == "lrelu":
        return jnp.where(x > 0, x, 0.2 * x)
    if name == "tanh":
        return jnp.tanh(x)
    if name == "selu":
        scale = 1.0507009873554805
        alpha = 1.6732632423543772
        return scale * jnp.where(x > 0, x, alpha * (jnp.exp(x) - 1.0))
    if name == "none":
        return x
    # TODO(synk): 'prelu' needs a learnable slope parameter; not implemented.
    raise ValueError(f"Unsupported activation: {name}")


def _mlp_kernel(fr_ref, fs_ref, w_ref, b_ref, out_ref, *,
                seg_offs, seg_rows, widths_pad, out_feat, n_layers, activ):
    """One batch tile of the MLP.

    fr_ref / fs_ref : (tile_B, feat_pad) bf16 activation tiles.
    w_ref           : packed bf16 weight slab (rows, lane_pad); segments:
                        rows[seg_offs[0] : +seg_rows[0]]  W0 half for fea_r
                        rows[seg_offs[1] : +seg_rows[1]]  W0 half for fea_s
                        rows[seg_offs[l+1] : +seg_rows[l+1]]  W_l  (l >= 1)
                      All segment offsets/rows are multiples of 16 (bf16 tile).
    b_ref           : f32 bias slab, row l = bias of layer l (zero padded).
    out_ref         : (tile_B, out_feat) output tile in the input dtype.
    Zero padding of weight cols / bias lanes is preserved by every supported
    activation (activ(0) == 0), and padded in-rows of the next layer's weight
    are zero, so padded lanes never contaminate real outputs.
    """
    fr = fr_ref[...]
    fs = fs_ref[...]

    def wseg(i, width):
        return w_ref[pl.ds(seg_offs[i], seg_rows[i]), :width]

    def bias(l, width):
        return b_ref[pl.ds(l, 1), :width]          # f32 (1, width)

    # Layer 0: fused concat  (x = [fea_r | fea_s]  =>  x @ W0 = fr@W0_r + fs@W0_s)
    w0c = widths_pad[0]
    h = (jnp.dot(fr, wseg(0, w0c), preferred_element_type=jnp.float32)
         + jnp.dot(fs, wseg(1, w0c), preferred_element_type=jnp.float32)
         + bias(0, w0c))
    if n_layers > 1:
        h = _activ(h, activ)

    # Remaining layers (last LinearBlock has activation='none', norm='none').
    for l in range(1, n_layers):
        wc = widths_pad[l]
        h = jnp.dot(h.astype(jnp.bfloat16), wseg(l + 1, wc),
                    preferred_element_type=jnp.float32) + bias(l, wc)
        if l < n_layers - 1:
            h = _activ(h, activ)

    out_ref[...] = h[:, :out_feat].astype(out_ref.dtype)


def pack_params(params, feature_len):
    """One-time packing of [(w, b), ...] (w: (in, out), b: (1, out)).

    Returns (w_pack bf16 slab, b_pack f32 slab, meta).  W0 is split into its
    fea_r / fea_s halves so the concat can be fused in the kernel.
    """
    n_layers = len(params)
    w0 = jnp.asarray(params[0][0], jnp.float32)
    assert w0.shape[0] == 2 * feature_len, "layer 0 must take concat(fea_r, fea_s)"

    widths = [int(w.shape[1]) for (w, _) in params]           # true out width / layer
    widths_pad = [_round_up(w, LANE) for w in widths]          # per-layer lane pad
    lane_pad = max(widths_pad)
    feat_pad = _round_up(feature_len, SUBL)

    def pad_w(w, rows_pad, cols_used):
        r, c = w.shape
        buf = jnp.zeros((rows_pad, lane_pad), jnp.float32)
        del cols_used  # columns beyond the true width stay zero
        return buf.at[:r, :c].set(jnp.asarray(w, jnp.float32))

    segs = [pad_w(w0[:feature_len, :], feat_pad, widths_pad[0]),   # W0 half for fea_r
            pad_w(w0[feature_len:, :], feat_pad, widths_pad[0])]   # W0 half for fea_s
    for l in range(1, n_layers):
        segs.append(pad_w(jnp.asarray(params[l][0], jnp.float32),
                          widths_pad[l - 1], widths_pad[l]))

    seg_offs, off = [], 0
    for s in segs:
        seg_offs.append(off)
        off += int(s.shape[0])
    w_pack = jnp.concatenate(segs, axis=0).astype(jnp.bfloat16)

    b_pack = jnp.zeros((_round_up(n_layers, 8), lane_pad), jnp.float32)
    for l, (w, b) in enumerate(params):
        b_pack = b_pack.at[l, :widths[l]].set(jnp.asarray(b, jnp.float32).reshape(-1))

    meta = dict(
        seg_offs=tuple(seg_offs),
        seg_rows=tuple(int(s.shape[0]) for s in segs),
        widths=tuple(widths),
        widths_pad=tuple(widths_pad),
        n_layers=n_layers,
        out_feat=int(widths[-1]),
        feat_pad=int(feat_pad),
        lane_pad=int(lane_pad),
    )
    return w_pack, b_pack, meta


def make_intrinsic_merger_forward(params, feature_len, activ="relu",
                                  row_tile=DEFAULT_ROW_TILE):
    """Returns a jitted forward(fea_r, fea_s) matching IntrinsicMerger.forward."""
    w_pack, b_pack, meta = pack_params(params, feature_len)
    kernel = functools.partial(
        _mlp_kernel,
        seg_offs=meta["seg_offs"], seg_rows=meta["seg_rows"],
        widths_pad=meta["widths_pad"], out_feat=meta["out_feat"],
        n_layers=meta["n_layers"], activ=activ)

    widths = meta["widths"]
    out_feat = meta["out_feat"]
    feat_pad = meta["feat_pad"]
    n_layers = meta["n_layers"]

    @jax.jit
    def forward(fea_r, fea_s):
        B = fea_r.shape[0]
        # NCHW with H = W = 1 (MLP input_dim == 2 * feature_len)
        fr2d = fea_r.reshape(B, -1).astype(jnp.bfloat16)
        fs2d = fea_s.reshape(B, -1).astype(jnp.bfloat16)
        assert fr2d.shape[1] == feature_len and fs2d.shape[1] == feature_len

        if feat_pad != feature_len:
            pad = feat_pad - feature_len
            fr2d = jnp.pad(fr2d, ((0, 0), (0, pad)))
            fs2d = jnp.pad(fs2d, ((0, 0), (0, pad)))

        # Row (batch) padding + tile choice: full sublanes always; >=512-row
        # tiles once the batch is large enough to amortize per-step overhead.
        b_min = _round_up(B, SUBL)
        tile = row_tile if b_min >= row_tile else b_min
        b_pad = _round_up(B, tile)
        if b_pad != B:
            fr2d = jnp.pad(fr2d, ((0, b_pad - B), (0, 0)))
            fs2d = jnp.pad(fs2d, ((0, b_pad - B), (0, 0)))
        grid = (b_pad // tile,)

        # Advisory cost estimate for XLA's scheduler.
        flops_per_row = 2 * (2 * feature_len * widths[0]
                             + sum(widths[l - 1] * widths[l] for l in range(1, n_layers)))
        transc_per_row = sum(widths[:-1]) if activ in ("tanh", "selu") else 0
        bytes_accessed = (fr2d.size * 2 + fs2d.size * 2 + w_pack.size * 2
                          + b_pack.size * 4
                          + b_pad * out_feat * jnp.dtype(fea_r.dtype).itemsize)

        out = pl.pallas_call(
            kernel,
            out_shape=jax.ShapeDtypeStruct((b_pad, out_feat), fea_r.dtype),
            grid_spec=pltpu.PrefetchScalarGridSpec(
                num_scalar_prefetch=0,
                grid=grid,
                in_specs=[
                    pl.BlockSpec((tile, feat_pad), lambda i: (i, 0)),
                    pl.BlockSpec((tile, feat_pad), lambda i: (i, 0)),
                    pl.BlockSpec(w_pack.shape, lambda i: (0, 0)),   # resident weights
                    pl.BlockSpec(b_pack.shape, lambda i: (0, 0)),   # resident biases
                ],
                out_specs=pl.BlockSpec((tile, out_feat), lambda i: (i, 0)),
            ),
            compiler_params=pltpu.CompilerParams(
                dimension_semantics=("parallel",)),
            cost_estimate=pl.CostEstimate(
                flops=b_pad * flops_per_row,
                transcendentals=b_pad * transc_per_row,
                bytes_accessed=int(bytes_accessed)),
        )(fr2d, fs2d, w_pack, b_pack)

        return out[:B].reshape(fea_r.shape)

    return forward


# ----------------------------- reference & demo -----------------------------

def _init_linear(key, in_dim, out_dim):
    """Deterministic init mirroring nn.Linear's uniform(-1/sqrt(in), 1/sqrt(in))."""
    kw, kb = jax.random.split(key)
    bound = 1.0 / (in_dim ** 0.5)
    w = jax.random.uniform(kw, (in_dim, out_dim), jnp.float32, -bound, bound)
    b = jax.random.uniform(kb, (1, out_dim), jnp.float32, -bound, bound)
    return w, b


def _reference_forward(fea_r, fea_s, params, activ="relu", match_bf16=False):
    """Pure-JAX reference.  match_bf16=True applies the same bf16 rounding of
    matmul operands the kernel uses (f32 accumulation, f32 bias/activation)."""
    B = fea_r.shape[0]
    h = jnp.concatenate([fea_r.reshape(B, -1), fea_s.reshape(B, -1)],
                        axis=1).astype(jnp.float32)
    for l, (w, b) in enumerate(params):
        w = jnp.asarray(w, jnp.float32)
        b = jnp.asarray(b, jnp.float32).reshape(1, -1)
        if match_bf16:
            h = h.astype(jnp.bfloat16).astype(jnp.float32)
            w = w.astype(jnp.bfloat16).astype(jnp.float32)
        h = h @ w + b
        if l < len(params) - 1:
            h = _activ(h, activ)
    return h.reshape(fea_r.shape).astype(fea_r.dtype)


if __name__ == "__main__":
    # IntrinsicMerger(feature_len=8, hidden_dim=32, n_layers=3, activ=...)
    B, FEAT, HIDDEN, N_LAYERS = 2, 8, 32, 3

    key = jax.random.PRNGKey(0)
    k_r, k_s, k_p = jax.random.split(key, 3)
    fea_r = jax.random.normal(k_r, (B, FEAT, 1, 1), jnp.float32)
    fea_s = jax.random.normal(k_s, (B, FEAT, 1, 1), jnp.float32)

    # MLP layer dims: [2*feature_len, hidden, ..., hidden, feature_len]
    dims = [2 * FEAT] + [HIDDEN] * (N_LAYERS - 1) + [FEAT]
    params = []
    for l in range(N_LAYERS):
        k_p, k_l = jax.random.split(k_p)
        params.append(_init_linear(k_l, dims[l], dims[l + 1]))

    # Check both a VPU activation (relu) and an EUP transcendental one (tanh).
    for activ_name in ("relu", "tanh"):
        forward = make_intrinsic_merger_forward(params, FEAT, activ_name)
        out = jax.block_until_ready(forward(fea_r, fea_s))
        assert out.shape == fea_r.shape

        ref_match = _reference_forward(fea_r, fea_s, params, activ_name, match_bf16=True)
        ref_f32 = _reference_forward(fea_r, fea_s, params, activ_name, match_bf16=False)
        assert jnp.allclose(out, ref_match, atol=2e-3, rtol=2e-3), \
            f"mismatch vs. bf16-matched reference ({activ_name})"
        assert jnp.allclose(out, ref_f32, atol=5e-2, rtol=5e-2), \
            f"mismatch vs. f32 reference ({activ_name})"

    print("KERNEL_OK")
</pallas_src>

<mosaic_0001>
module attributes {stable_mosaic.version = 11 : i64} {
  func.func @_mlp_kernel(%arg0: i32, %arg1: memref<16x16xbf16, #tpu.memory_space<vmem>>, %arg2: memref<16x16xbf16, #tpu.memory_space<vmem>>, %arg3: memref<288x128xbf16, #tpu.memory_space<vmem>>, %arg4: memref<8x128xf32, #tpu.memory_space<vmem>>, %arg5: memref<16x8xf32, #tpu.memory_space<vmem>>) attributes {dimension_semantics = [#tpu.dimension_semantics<parallel>], iteration_bounds = array<i64: 1>, scalar_prefetch = 0 : i64, scratch_operands = 0 : i64, tpu.core_type = #tpu.core_type<tc>, window_params = [{transform_indices = @transform_0, window_bounds = array<i64: 16, 16>}, {transform_indices = @transform_1, window_bounds = array<i64: 16, 16>}, {pipeline_mode = #tpu.pipeline_mode<synchronous>, transform_indices = @transform_2, window_bounds = array<i64: 288, 128>}, {pipeline_mode = #tpu.pipeline_mode<synchronous>, transform_indices = @transform_3, window_bounds = array<i64: 8, 128>}, {transform_indices = @transform_4, window_bounds = array<i64: 16, 8>}]} {
    %c0 = arith.constant 0 : index
    %c0_0 = arith.constant 0 : index
    %0 = vector.load %arg1[%c0, %c0_0] : memref<16x16xbf16, #tpu.memory_space<vmem>>, vector<16x16xbf16>
    %c0_1 = arith.constant 0 : index
    %c0_2 = arith.constant 0 : index
    %1 = vector.load %arg2[%c0_1, %c0_2] : memref<16x16xbf16, #tpu.memory_space<vmem>>, vector<16x16xbf16>
    %c0_3 = arith.constant 0 : index
    %c0_4 = arith.constant 0 : index
    %2 = vector.load %arg3[%c0_3, %c0_4] : memref<288x128xbf16, #tpu.memory_space<vmem>>, vector<16x128xbf16>
    %cst = arith.constant dense<0.000000e+00> : vector<16x128xf32>
    %3 = tpu.matmul %0, %2, %cst {dimension_numbers = #tpu.dot_dimension_numbers<[1], [0], [0], [1], [0, 0, 1, 1], [], []>} : vector<16x16xbf16>, vector<16x128xbf16>, vector<16x128xf32> -> vector<16x128xf32>
    %c16 = arith.constant 16 : index
    %c0_5 = arith.constant 0 : index
    %4 = vector.load %arg3[%c16, %c0_5] : memref<288x128xbf16, #tpu.memory_space<vmem>>, vector<16x128xbf16>
    %cst_6 = arith.constant dense<0.000000e+00> : vector<16x128xf32>
    %5 = tpu.matmul %1, %4, %cst_6 {dimension_numbers = #tpu.dot_dimension_numbers<[1], [0], [0], [1], [0, 0, 1, 1], [], []>} : vector<16x16xbf16>, vector<16x128xbf16>, vector<16x128xf32> -> vector<16x128xf32>
    %6 = arith.addf %3, %5 : vector<16x128xf32>
    %c0_7 = arith.constant 0 : index
    %c0_8 = arith.constant 0 : index
    %7 = vector.load %arg4[%c0_7, %c0_8] : memref<8x128xf32, #tpu.memory_space<vmem>>, vector<1x128xf32>
    %8 = vector.broadcast %7 : vector<1x128xf32> to vector<16x128xf32>
    %9 = arith.addf %6, %8 : vector<16x128xf32>
    %cst_9 = arith.constant 0.000000e+00 : f32
    %10 = vector.broadcast %cst_9 : f32 to vector<16x128xf32>
    %11 = arith.maximumf %9, %10 : vector<16x128xf32>
    %12 = arith.truncf %11 : vector<16x128xf32> to vector<16x128xbf16>
    %c32 = arith.constant 32 : index
    %c0_10 = arith.constant 0 : index
    %13 = vector.load %arg3[%c32, %c0_10] : memref<288x128xbf16, #tpu.memory_space<vmem>>, vector<128x128xbf16>
    %cst_11 = arith.constant dense<0.000000e+00> : vector<16x128xf32>
    %14 = tpu.matmul %12, %13, %cst_11 {dimension_numbers = #tpu.dot_dimension_numbers<[1], [0], [0], [1], [0, 0, 1, 1], [], []>} : vector<16x128xbf16>, vector<128x128xbf16>, vector<16x128xf32> -> vector<16x128xf32>
    %c1 = arith.constant 1 : index
    %c0_12 = arith.constant 0 : index
    %15 = vector.load %arg4[%c1, %c0_12] : memref<8x128xf32, #tpu.memory_space<vmem>>, vector<1x128xf32>
    %16 = vector.broadcast %15 : vector<1x128xf32> to vector<16x128xf32>
    %17 = arith.addf %14, %16 : vector<16x128xf32>
    %cst_13 = arith.constant 0.000000e+00 : f32
    %18 = vector.broadcast %cst_13 : f32 to vector<16x128xf32>
    %19 = arith.maximumf %17, %18 : vector<16x128xf32>
    %20 = arith.truncf %19 : vector<16x128xf32> to vector<16x128xbf16>
    %c160 = arith.constant 160 : index
    %c0_14 = arith.constant 0 : index
    %21 = vector.load %arg3[%c160, %c0_14] : memref<288x128xbf16, #tpu.memory_space<vmem>>, vector<128x128xbf16>
    %cst_15 = arith.constant dense<0.000000e+00> : vector<16x128xf32>
    %22 = tpu.matmul %20, %21, %cst_15 {dimension_numbers = #tpu.dot_dimension_numbers<[1], [0], [0], [1], [0, 0, 1, 1], [], []>} : vector<16x128xbf16>, vector<128x128xbf16>, vector<16x128xf32> -> vector<16x128xf32>
    %c2 = arith.constant 2 : index
    %c0_16 = arith.constant 0 : index
    %23 = vector.load %arg4[%c2, %c0_16] : memref<8x128xf32, #tpu.memory_space<vmem>>, vector<1x128xf32>
    %24 = vector.broadcast %23 : vector<1x128xf32> to vector<16x128xf32>
    %25 = arith.addf %22, %24 : vector<16x128xf32>
    %26 = vector.extract_strided_slice %25 {offsets = [0, 0], sizes = [16, 8], strides = [1, 1]} : vector<16x128xf32> to vector<16x8xf32>
    %c0_17 = arith.constant 0 : index
    %c0_18 = arith.constant 0 : index
    %27 = vector.load %arg5[%c0_17, %c0_18] : memref<16x8xf32, #tpu.memory_space<vmem>>, vector<16x8xf32>
    tpu.vector_store %arg5[%c0_17, %c0_18], %26 {strides = array<i32>} : memref<16x8xf32, #tpu.memory_space<vmem>>, vector<16x8xf32>,
    return
  }
  func.func @transform_0(%arg0: i32) -> (i32, i32) {
    %c0_i32 = arith.constant 0 : i32
    %c0_i32_0 = arith.constant 0 : i32
    return %arg0, %c0_i32 : i32, i32
  }
  func.func @transform_1(%arg0: i32) -> (i32, i32) {
    %c0_i32 = arith.constant 0 : i32
    %c0_i32_0 = arith.constant 0 : i32
    return %arg0, %c0_i32 : i32, i32
  }
  func.func @transform_2(%arg0: i32) -> (i32, i32) {
    %c0_i32 = arith.constant 0 : i32
    %c0_i32_0 = arith.constant 0 : i32
    %c0_i32_1 = arith.constant 0 : i32
    return %c0_i32, %c0_i32_0 : i32, i32
  }
  func.func @transform_3(%arg0: i32) -> (i32, i32) {
    %c0_i32 = arith.constant 0 : i32
    %c0_i32_0 = arith.constant 0 : i32
    %c0_i32_1 = arith.constant 0 : i32
    return %c0_i32, %c0_i32_0 : i32, i32
  }
  func.func @transform_4(%arg0: i32) -> (i32, i32) {
    %c0_i32 = arith.constant 0 : i32
    %c0_i32_0 = arith.constant 0 : i32
    return %arg0, %c0_i32 : i32, i32
  }
}

</mosaic_0001>

<llo_original>
// kernel: forward.1
$region0: #{forward.1}
  #allocation0 [shape = 'u32[]', space=smem, size = 0x4, offset = 0x4, fixed_abs, tag = 'smem constant byte address 0x4 - core index']
  #allocation1 [shape = 'u32[72,128]{1,0:T(1,128)}', space=vmem, size = 0x9000, scoped, tag = 'internal scratch']
  %s0 = inlined_call_operand.vmem [shape: bf16[16,16], index: 0, kind: input, shape index: {}]
  %s1 = inlined_call_operand.vmem [shape: bf16[16,16], index: 1, kind: input, shape index: {}]
  %s2 = inlined_call_operand.hbm [shape: bf16[288,128], index: 2, kind: input, shape index: {}]
  %s3 = inlined_call_operand.vmem [shape: f32[8,128], index: 3, kind: input, shape index: {}]
  %s4 = inlined_call_operand.vmem [shape: f32[16,8], index: 4, kind: output, shape index: {}]
  %s5 = sld [smem:[#allocation0]]
  $region30: #{forward.1} parent=0
    _
  %s7 = ssub.s32 1, %s5
  %s8 = scalar_select 0, %s7, %s5
  $region1: #{forward.1} parent=0
    #allocation2 [shape = 'u8[73728]{0}', space=vmem, size = 0x12000, scoped, tag = 'input window, operand 2, single buffered']
    #allocation3 [shape = 's32[1]{0}', space=sflag, size = 0x4, scoped, tag = 'scoped memory for forward.1']
    %9 = vsyncpa [#allocation3], 0
    // Predicated region
    $region2: #{forward.1} parent=1 // pred_check
      _
    $region3: #{forward.1} parent=1 // pred_check_branch
      %11 = sbr.rel (0) target = $region5
    $region4: #{forward.1} parent=1 // pred_region
      _
    $region5: #{forward.1} parent=1 // pred_fallthru
      _
    // Predicated region
    $region6: #{forward.1} parent=1 // pred_check
      _
    $region7: #{forward.1} parent=1 // pred_check_branch
      %13 = sbr.rel (0) target = $region9
    $region8: #{forward.1} parent=1 // pred_region
      _
    $region9: #{forward.1} parent=1 // pred_fallthru
      _
    // Predicated region
    $region10: #{forward.1} parent=1 // pred_check
      _
    $region11: #{forward.1} parent=1 // pred_check_branch
      %15 = sbr.rel (0) target = $region13
    $region12: #{forward.1} parent=1 // pred_region
      %17 = vsyncadd [#allocation3], 0
      %s18 = sshll.u32 %s2, 4
      %s19 = int_to_ptr.hbm [resolvable:$true] %s18
      %s20 = sshll.u32 [#allocation2], 4
      %s21 = int_to_ptr.vmem [resolvable:$true] %s20
      %26 = dma.hbm_to_vmem [thread:$0]  %s19, 2304, %s21, [#allocation3], 64, 64, 4
    $region13: #{forward.1} parent=1 // pred_fallthru
      _
    // Predicated region
    $region14: #{forward.1} parent=1 // pred_check
      _
    $region15: #{forward.1} parent=1 // pred_check_branch
      %28 = sbr.rel (0) target = $region17
    $region16: #{forward.1} parent=1 // pred_region
      _
    $region17: #{forward.1} parent=1 // pred_fallthru
      _
    // Predicated region
    $region18: #{forward.1} parent=1 // pred_check
      _
    $region19: #{forward.1} parent=1 // pred_check_branch
      %30 = sbr.rel (0) target = $region21
    $region20: #{forward.1} parent=1 // pred_region
      %32 = dma.done [#allocation3], 2304
    $region21: #{forward.1} parent=1 // pred_fallthru
      _
    %v34 = vld [vmem:[%s0] sm:$0xf]
    %v35 = vld [vmem:[%s0 + $0x4] sm:$0xf]
    %v36 = vld [vmem:[%s1] sm:$0xf]
    %v37 = vld [vmem:[%s1 + $0x4] sm:$0xf]
    %v38 = vld [vmem:[#allocation2] sm:$0xf]
    %v39 = vld [vmem:[#allocation2 + $0x4] sm:$0xf]
    %v40 = vld [vmem:[#allocation2 + $0x8] sm:$0xf]
    %v41 = vld [vmem:[#allocation2 + $0xc] sm:$0xf]
    %v44 = vunpack.c.l.b16 %v36
    %v45 = vunpack.c.l.b16 %v37
    %v46 = vpack.c.b16 %v45, %v44
    %v49 = vunpack.c.l.b16 %v40
    %v50 = vunpack.c.l.b16 %v41
    %v51 = vpack.c.b16 %v50, %v49
    %vm53 = vcmask 130048
    %v55 = vsel %vm53, %v46, 0
    %57 = vmatpush.bf16.msra.mxu0 0
    %58 = vmatpush.bf16.msra.mxu0 0
    %59 = vmatpush.bf16.msra.mxu0 0
    %60 = vmatpush.bf16.msra.mxu0 0
    %61 = vmatpush.bf16.msra.mxu0 0
    %62 = vmatpush.bf16.msra.mxu0 0
    %63 = vmatpush.bf16.msra.mxu0 0
    %64 = vmatpush.bf16.msra.mxu0 %v51
    %65 = vmatmul.bf16.gmra.mxu0 %v55
    %v66 = vpop.f32.mrf.mxu0
    %v67 = vadd.f32 0.0, %v66
    %v68 = vpop.f32.mrf.mxu0
    %v69 = vadd.f32 0.0, %v68
    %70 = vdwg.mxu0
    %v73 = vunpack.c.l.b16 %v34
    %v74 = vunpack.c.l.b16 %v35
    %v75 = vpack.c.b16 %v74, %v73
    %v78 = vunpack.c.l.b16 %v38
    %v79 = vunpack.c.l.b16 %v39
    %v80 = vpack.c.b16 %v79, %v78
    %v83 = vsel %vm53, %v75, 0
    %85 = vmatpush.bf16.msra.mxu0 0
    %86 = vmatpush.bf16.msra.mxu0 0
    %87 = vmatpush.bf16.msra.mxu0 0
    %88 = vmatpush.bf16.msra.mxu0 0
    %89 = vmatpush.bf16.msra.mxu0 0
    %90 = vmatpush.bf16.msra.mxu0 0
    %91 = vmatpush.bf16.msra.mxu0 0
    %92 = vmatpush.bf16.msra.mxu0 %v80
    %93 = vmatmul.bf16.gmra.mxu0 %v83
    %v94 = vpop.f32.mrf.mxu0
    %v95 = vadd.f32 %v67, %v94
    %v96 = vpop.f32.mrf.mxu0
    %v97 = vadd.f32 %v69, %v96
    %98 = vdwg.mxu0
    %v99 = vld [vmem:[%s3] sm:$0x1]
    %v100 = vperm.slane %v99, 0
    %v101 = vadd.f32 %v95, %v100
    %v102 = vadd.f32 %v97, %v100
    %v103 = vmax.f32 %v101, 0.0
    %v104 = vmax.f32 %v102, 0.0
    %v105 = vpack.c.bf16 %v104, %v103
    %v106 = vld [vmem:[#allocation2 + $0x10] sm:$0xf]
    %v107 = vld [vmem:[#allocation2 + $0x14] sm:$0xf]
    %v108 = vld [vmem:[#allocation2 + $0x18] sm:$0xf]
    %v109 = vld [vmem:[#allocation2 + $0x1c] sm:$0xf]
    %v110 = vld [vmem:[#allocation2 + $0x20] sm:$0xf]
    %v111 = vld [vmem:[#allocation2 + $0x24] sm:$0xf]
    %v112 = vld [vmem:[#allocation2 + $0x28] sm:$0xf]
    %v113 = vld [vmem:[#allocation2 + $0x2c] sm:$0xf]
    %v114 = vld [vmem:[#allocation2 + $0x30] sm:$0xf]
    %v115 = vld [vmem:[#allocation2 + $0x34] sm:$0xf]
    %v116 = vld [vmem:[#allocation2 + $0x38] sm:$0xf]
    %v117 = vld [vmem:[#allocation2 + $0x3c] sm:$0xf]
    %v118 = vld [vmem:[#allocation2 + $0x40] sm:$0xf]
    %v119 = vld [vmem:[#allocation2 + $0x44] sm:$0xf]
    %v120 = vld [vmem:[#allocation2 + $0x48] sm:$0xf]
    %v121 = vld [vmem:[#allocation2 + $0x4c] sm:$0xf]
    %v122 = vld [vmem:[%s3 + $0x1] sm:$0x1]
    %v123 = vperm.slane %v122, 0
    %v140 = vunpack.c.l.b16 %v106
    %v141 = vunpack.c.l.b16 %v107
    %v142 = vunpack.c.l.b16 %v108
    %v143 = vunpack.c.l.b16 %v109
    %v144 = vunpack.c.l.b16 %v110
    %v145 = vunpack.c.l.b16 %v111
    %v146 = vunpack.c.l.b16 %v112
    %v147 = vunpack.c.l.b16 %v113
    %v148 = vunpack.c.l.b16 %v114
    %v149 = vunpack.c.l.b16 %v115
    %v150 = vunpack.c.l.b16 %v116
    %v151 = vunpack.c.l.b16 %v117
    %v152 = vunpack.c.l.b16 %v118
    %v153 = vunpack.c.l.b16 %v119
    %v154 = vunpack.c.l.b16 %v120
    %v155 = vunpack.c.l.b16 %v121
    %v156 = vpack.c.b16 %v141, %v140
    %v157 = vpack.c.b16 %v143, %v142
    %v158 = vpack.c.b16 %v145, %v144
    %v159 = vpack.c.b16 %v147, %v146
    %v160 = vpack.c.b16 %v149, %v148
    %v161 = vpack.c.b16 %v151, %v150
    %v162 = vpack.c.b16 %v153, %v152
    %v163 = vpack.c.b16 %v155, %v154
    %172 = vmatpush.bf16.msra.mxu0 %v163
    %173 = vmatpush.bf16.msra.mxu0 %v162
    %174 = vmatpush.bf16.msra.mxu0 %v161
    %175 = vmatpush.bf16.msra.mxu0 %v160
    %176 = vmatpush.bf16.msra.mxu0 %v159
    %177 = vmatpush.bf16.msra.mxu0 %v158
    %178 = vmatpush.bf16.msra.mxu0 %v157
    %179 = vmatpush.bf16.msra.mxu0 %v156
    %180 = vmatmul.bf16.gmra.mxu0 %v105
    %v181 = vpop.f32.mrf.mxu0
    %v182 = vadd.f32 %v123, %v181
    %v183 = vpop.f32.mrf.mxu0
    %v184 = vadd.f32 %v123, %v183
    %185 = vdwg.mxu0
    %v186 = vmax.f32 %v182, 0.0
    %v187 = vmax.f32 %v184, 0.0
    %v188 = vpack.c.bf16 %v187, %v186
    %v189 = vld [vmem:[#allocation2 + $0x50] sm:$0xf]
    %v190 = vld [vmem:[#allocation2 + $0x54] sm:$0xf]
    %v191 = vld [vmem:[#allocation2 + $0x58] sm:$0xf]
    %v192 = vld [vmem:[#allocation2 + $0x5c] sm:$0xf]
    %v193 = vld [vmem:[#allocation2 + $0x60] sm:$0xf]
    %v194 = vld [vmem:[#allocation2 + $0x64] sm:$0xf]
    %v195 = vld [vmem:[#allocation2 + $0x68] sm:$0xf]
    %v196 = vld [vmem:[#allocation2 + $0x6c] sm:$0xf]
    %v197 = vld [vmem:[#allocation2 + $0x70] sm:$0xf]
    %v198 = vld [vmem:[#allocation2 + $0x74] sm:$0xf]
    %v199 = vld [vmem:[#allocation2 + $0x78] sm:$0xf]
    %v200 = vld [vmem:[#allocation2 + $0x7c] sm:$0xf]
    %v201 = vld [vmem:[#allocation2 + $0x80] sm:$0xf]
    %v202 = vld [vmem:[#allocation2 + $0x84] sm:$0xf]
    %v203 = vld [vmem:[#allocation2 + $0x88] sm:$0xf]
    %v204 = vld [vmem:[#allocation2 + $0x8c] sm:$0xf]
    %v205 = vld [vmem:[%s3 + $0x2] sm:$0x1]
    %v206 = vperm.slane %v205, 0
    %v223 = vunpack.c.l.b16 %v189
    %v224 = vunpack.c.l.b16 %v190
    %v225 = vunpack.c.l.b16 %v191
    %v226 = vunpack.c.l.b16 %v192
    %v227 = vunpack.c.l.b16 %v193
    %v228 = vunpack.c.l.b16 %v194
    %v229 = vunpack.c.l.b16 %v195
    %v230 = vunpack.c.l.b16 %v196
    %v231 = vunpack.c.l.b16 %v197
    %v232 = vunpack.c.l.b16 %v198
    %v233 = vunpack.c.l.b16 %v199
    %v234 = vunpack.c.l.b16 %v200
    %v235 = vunpack.c.l.b16 %v201
    %v236 = vunpack.c.l.b16 %v202
    %v237 = vunpack.c.l.b16 %v203
    %v238 = vunpack.c.l.b16 %v204
    %v239 = vpack.c.b16 %v224, %v223
    %v240 = vpack.c.b16 %v226, %v225
    %v241 = vpack.c.b16 %v228, %v227
    %v242 = vpack.c.b16 %v230, %v229
    %v243 = vpack.c.b16 %v232, %v231
    %v244 = vpack.c.b16 %v234, %v233
    %v245 = vpack.c.b16 %v236, %v235
    %v246 = vpack.c.b16 %v238, %v237
    %255 = vmatpush.bf16.msra.mxu0 %v246
    %256 = vmatpush.bf16.msra.mxu0 %v245
    %257 = vmatpush.bf16.msra.mxu0 %v244
    %258 = vmatpush.bf16.msra.mxu0 %v243
    %259 = vmatpush.bf16.msra.mxu0 %v242
    %260 = vmatpush.bf16.msra.mxu0 %v241
    %261 = vmatpush.bf16.msra.mxu0 %v240
    %262 = vmatpush.bf16.msra.mxu0 %v239
    %263 = vmatmul.bf16.gmra.mxu0 %v188
    %v264 = vpop.f32.mrf.mxu0
    %v265 = vadd.f32 %v206, %v264
    %v266 = vpop.f32.mrf.mxu0
    %v267 = vadd.f32 %v206, %v266
    %268 = vdwg.mxu0
    %vm269 = vcmask 64512
    %270 = vst.msk [vmem:[%s4] sm:$0xff] %vm269, %v265
    %271 = vst.msk [vmem:[%s4 + $0x8] sm:$0xff] %vm269, %v267
    // Predicated region
    $region22: #{forward.1} parent=1 // pred_check
      _
    $region23: #{forward.1} parent=1 // pred_check_branch
      %273 = sbr.rel (0) target = $region25
    $region24: #{forward.1} parent=1 // pred_region
      _
    $region25: #{forward.1} parent=1 // pred_fallthru
      _
    // Predicated region
    $region26: #{forward.1} parent=1 // pred_check
      _
    $region27: #{forward.1} parent=1 // pred_check_branch
      %275 = sbr.rel (0) target = $region29
    $region28: #{forward.1} parent=1 // pred_region
      _
    $region29: #{forward.1} parent=1 // pred_fallthru
      _
    %276 = vsyncpa [#allocation3], 1

</llo_original>
